<compile_context>
chip_gen: v7x
topology: tpu7x:2x2x1
jax: 0.10.0
libtpu: 0.0.40
codegen_flags: <defaults>
</compile_context>

<pallas_src>
import jax
import jax.numpy as jnp
from jax.experimental import pallas as pl
from jax.experimental.pallas import tpu as pltpu

EPS = 1e-6
_LANE = 128          # TPU lane width
_MIN_TILE = 16       # multiple of 16: fine for f32 (8) and bf16 (16) sublanes
_BLOCK_BYTES = 2 << 20  # ~2 MiB per input block; in+out double-buffered ~8 MiB


def _round_up(a, b):
    return (a + b - 1) // b * b


def _norm_kernel(alpha_ref, beta_ref, x_ref, o_ref):
    """Plain row-wise LayerNormalization.  Block: (tile_rows, d)."""
    x = x_ref[...].astype(jnp.float32)
    d = x.shape[-1]
    alpha = alpha_ref[0]
    beta = beta_ref[0]
    mean = jnp.sum(x, axis=-1, keepdims=True) * jnp.float32(1.0 / d)
    diff = x - mean
    var = jnp.sum(diff * diff, axis=-1, keepdims=True) * jnp.float32(1.0 / max(d - 1, 1))
    # reciprocal on the EUP slot (separate VLIW slot) instead of a VALU divide
    inv = pl.reciprocal(jnp.sqrt(var) + jnp.float32(EPS), approx=True)
    o_ref[...] = (diff * (alpha * inv) + beta).astype(o_ref.dtype)


def _norm_kernel_packed(alpha_ref, beta_ref, x_ref, s_ref, st_ref, o_ref):
    """Lane-packed LayerNormalization for small d (g rows per 128-lane row).

    x block: (tile_rows, g*d).  s: (g*d, g) one-hot segment matrix,
    st: (g, g*d) its transpose.  Segment reductions / broadcasts run on the
    otherwise-idle MXU so loads/stores stay full lane width.
    """
    x = x_ref[...].astype(jnp.float32)
    s = s_ref[...]
    st = st_ref[...]
    g = s.shape[1]
    d = s.shape[0] // g
    alpha = alpha_ref[0]
    beta = beta_ref[0]

    s1 = jnp.dot(x, s, preferred_element_type=jnp.float32)            # (tr, g)
    mean = s1 * jnp.float32(1.0 / d)
    mean_b = jnp.dot(mean, st, preferred_element_type=jnp.float32)    # (tr, g*d)
    diff = x - mean_b                                                  # two-pass: stable
    s2 = jnp.dot(diff * diff, s, preferred_element_type=jnp.float32)  # (tr, g)
    std = jnp.sqrt(s2 * jnp.float32(1.0 / max(d - 1, 1)))
    inv = pl.reciprocal(std + jnp.float32(EPS), approx=True)          # EUP slot
    inv_b = jnp.dot(inv * alpha, st, preferred_element_type=jnp.float32)
    o_ref[...] = (diff * inv_b + beta).astype(o_ref.dtype)


def _layer_norm_pallas(x2d, alpha, beta):
    rows, d = x2d.shape
    dtype = x2d.dtype
    itemsize = jnp.dtype(dtype).itemsize

    # Lane-dense packing when d_model is a small divisor of 128 (e.g. 32).
    pack = (d < _LANE) and (_LANE % d == 0) and (d > 1)
    g = _LANE // d if pack else 1
    lane_w = g * d

    # Pad rows to a multiple of g and pack g rows per 128-lane row.
    rows_g = _round_up(rows, g)
    if rows_g != rows:
        x2d = jnp.pad(x2d, ((0, rows_g - rows), (0, 0)))
    packed = x2d.reshape(rows_g // g, lane_w)
    prow = packed.shape[0]

    # Tile rows: as large as the ~2 MiB block budget allows, but capped so the
    # grid has >= 2 'parallel' steps when there is enough work (v7x megacore).
    budget_rows = max(_MIN_TILE,
                      (_BLOCK_BYTES // (lane_w * itemsize)) // _MIN_TILE * _MIN_TILE)
    tile = min(budget_rows, _round_up(pl.cdiv(prow, 2), _MIN_TILE))
    tile = max(tile, _MIN_TILE)

    prow_pad = _round_up(prow, tile)
    if prow_pad != prow:
        packed = jnp.pad(packed, ((0, prow_pad - prow), (0, 0)))  # zero rows are benign
    grid = (prow_pad // tile,)

    smem_spec = pl.BlockSpec(memory_space=pltpu.MemorySpace.SMEM)
    x_spec = pl.BlockSpec((tile, lane_w), lambda i: (i, 0))
    o_spec = pl.BlockSpec((tile, lane_w), lambda i: (i, 0))

    if pack:
        seg = jnp.arange(lane_w, dtype=jnp.int32) // d
        s_mat = (seg[:, None] == jnp.arange(g, dtype=jnp.int32)[None, :]).astype(jnp.float32)
        st_mat = jnp.transpose(s_mat)  # tiny constant, built outside the kernel
        kernel = _norm_kernel_packed
        in_specs = [smem_spec, smem_spec, x_spec,
                    pl.BlockSpec((lane_w, g), lambda i: (0, 0)),
                    pl.BlockSpec((g, lane_w), lambda i: (0, 0))]
        args = (alpha, beta, packed, s_mat, st_mat)
    else:
        kernel = _norm_kernel
        in_specs = [smem_spec, smem_spec, x_spec]
        args = (alpha, beta, packed)

    out = pl.pallas_call(
        kernel,
        out_shape=jax.ShapeDtypeStruct((prow_pad, lane_w), dtype),
        grid_spec=pltpu.PrefetchScalarGridSpec(
            num_scalar_prefetch=0,
            grid=grid,
            in_specs=in_specs,
            out_specs=o_spec,
        ),
        compiler_params=pltpu.CompilerParams(
            dimension_semantics=("parallel",),
            vmem_limit_bytes=32 << 20,
        ),
    )(*args)

    # Undo padding / packing.
    out = out[:prow].reshape(rows_g, d)[:rows]
    return out


def encoder_forward(x, src_mask, alpha, beta, layers=()):
    """Mirrors Encoder.forward: apply each layer, then LayerNormalization."""
    # TODO(synk): the reference nn.ModuleList layers are unspecified; an empty
    # layer stack (identity) is used here, matching nn.ModuleList([]).
    for layer in layers:
        x = layer(x, src_mask)

    b, s, d = x.shape
    out2d = _layer_norm_pallas(x.reshape(b * s, d), alpha, beta)
    return out2d.reshape(b, s, d)


def _reference_norm(x, alpha, beta):
    d = x.shape[-1]
    mean = jnp.mean(x, axis=-1, keepdims=True)
    std = jnp.sqrt(jnp.sum((x - mean) ** 2, axis=-1, keepdims=True) / (d - 1))
    return alpha[0] * (x - mean) / (std + EPS) + beta[0]


if __name__ == "__main__":
    key = jax.random.PRNGKey(0)

    # Deterministic parameter init, matching nn.Parameter(torch.ones(1)).
    alpha = jnp.ones((1,), dtype=jnp.float32)
    beta = jnp.ones((1,), dtype=jnp.float32)

    # Case 1: small d_model (exercises the lane-packed path, d=32 < 128).
    B, S, D = 2, 8, 32
    x = jax.random.normal(key, (B, S, D), dtype=jnp.float32)
    src_mask = jnp.ones((B, 1, 1, S), dtype=jnp.float32)  # unused (empty layer stack)
    out = encoder_forward(x, src_mask, alpha, beta)
    jax.block_until_ready(out)
    ref = _reference_norm(x, alpha, beta)
    # approx reciprocal (EUP) is accurate well within this tolerance
    assert jnp.allclose(out, ref, atol=5e-3, rtol=5e-3), float(jnp.max(jnp.abs(out - ref)))

    # Case 2: lane-aligned d_model (exercises the plain path, d=128).
    B2, S2, D2 = 2, 8, 128
    x2 = jax.random.normal(jax.random.PRNGKey(1), (B2, S2, D2), dtype=jnp.float32)
    src_mask2 = jnp.ones((B2, 1, 1, S2), dtype=jnp.float32)
    out2 = encoder_forward(x2, src_mask2, alpha, beta)
    jax.block_until_ready(out2)
    ref2 = _reference_norm(x2, alpha, beta)
    assert jnp.allclose(out2, ref2, atol=5e-3, rtol=5e-3), float(jnp.max(jnp.abs(out2 - ref2)))

    print("KERNEL_OK")
</pallas_src>

<mosaic_0001>
module attributes {stable_mosaic.version = 11 : i64} {
  func.func @_norm_kernel_packed(%arg0: i32, %arg1: memref<1xf32, #tpu.memory_space<smem>>, %arg2: memref<1xf32, #tpu.memory_space<smem>>, %arg3: memref<16x128xf32, #tpu.memory_space<vmem>>, %arg4: memref<128x4xf32, #tpu.memory_space<vmem>>, %arg5: memref<4x128xf32, #tpu.memory_space<vmem>>, %arg6: memref<16x128xf32, #tpu.memory_space<vmem>>) attributes {dimension_semantics = [#tpu.dimension_semantics<parallel>], iteration_bounds = array<i64: 1>, scalar_prefetch = 0 : i64, scratch_operands = 0 : i64, tpu.core_type = #tpu.core_type<tc>, window_params = [{transform_indices = @transform_0, window_bounds = array<i64: 1>}, {transform_indices = @transform_1, window_bounds = array<i64: 1>}, {transform_indices = @transform_2, window_bounds = array<i64: 16, 128>}, {pipeline_mode = #tpu.pipeline_mode<synchronous>, transform_indices = @transform_3, window_bounds = array<i64: 128, 4>}, {pipeline_mode = #tpu.pipeline_mode<synchronous>, transform_indices = @transform_4, window_bounds = array<i64: 4, 128>}, {transform_indices = @transform_5, window_bounds = array<i64: 16, 128>}]} {
    %c0 = arith.constant 0 : index
    %c0_0 = arith.constant 0 : index
    %0 = vector.load %arg3[%c0, %c0_0] : memref<16x128xf32, #tpu.memory_space<vmem>>, vector<16x128xf32>
    %c0_1 = arith.constant 0 : index
    %c0_2 = arith.constant 0 : index
    %1 = vector.load %arg4[%c0_1, %c0_2] : memref<128x4xf32, #tpu.memory_space<vmem>>, vector<128x4xf32>
    %c0_3 = arith.constant 0 : index
    %c0_4 = arith.constant 0 : index
    %2 = vector.load %arg5[%c0_3, %c0_4] : memref<4x128xf32, #tpu.memory_space<vmem>>, vector<4x128xf32>
    %c0_5 = arith.constant 0 : index
    %3 = memref.load %arg1[%c0_5] : memref<1xf32, #tpu.memory_space<smem>>
    %c0_6 = arith.constant 0 : index
    %4 = memref.load %arg2[%c0_6] : memref<1xf32, #tpu.memory_space<smem>>
    %cst = arith.constant dense<0.000000e+00> : vector<16x4xf32>
    %5 = tpu.matmul %0, %1, %cst {dimension_numbers = #tpu.dot_dimension_numbers<[1], [0], [0], [1], [0, 0, 1, 1], [], []>} : vector<16x128xf32>, vector<128x4xf32>, vector<16x4xf32> -> vector<16x4xf32>
    %cst_7 = arith.constant 3.125000e-02 : f32
    %6 = vector.broadcast %cst_7 : f32 to vector<16x4xf32>
    %7 = arith.mulf %5, %6 : vector<16x4xf32>
    %cst_8 = arith.constant dense<0.000000e+00> : vector<16x128xf32>
    %8 = tpu.matmul %7, %2, %cst_8 {dimension_numbers = #tpu.dot_dimension_numbers<[1], [0], [0], [1], [0, 0, 1, 1], [], []>} : vector<16x4xf32>, vector<4x128xf32>, vector<16x128xf32> -> vector<16x128xf32>
    %9 = arith.subf %0, %8 : vector<16x128xf32>
    %10 = arith.mulf %9, %9 : vector<16x128xf32>
    %cst_9 = arith.constant dense<0.000000e+00> : vector<16x4xf32>
    %11 = tpu.matmul %10, %1, %cst_9 {dimension_numbers = #tpu.dot_dimension_numbers<[1], [0], [0], [1], [0, 0, 1, 1], [], []>} : vector<16x128xf32>, vector<128x4xf32>, vector<16x4xf32> -> vector<16x4xf32>
    %cst_10 = arith.constant 0.0322580636 : f32
    %12 = vector.broadcast %cst_10 : f32 to vector<16x4xf32>
    %13 = arith.mulf %11, %12 : vector<16x4xf32>
    %14 = math.sqrt %13 : vector<16x4xf32>
    %cst_11 = arith.constant 9.99999997E-7 : f32
    %15 = vector.broadcast %cst_11 : f32 to vector<16x4xf32>
    %16 = arith.addf %14, %15 : vector<16x4xf32>
    %17 = tpu.reciprocal %16 {approx = true} : vector<16x4xf32> -> vector<16x4xf32>
    %18 = vector.broadcast %3 : f32 to vector<16x4xf32>
    %19 = arith.mulf %17, %18 : vector<16x4xf32>
    %cst_12 = arith.constant dense<0.000000e+00> : vector<16x128xf32>
    %20 = tpu.matmul %19, %2, %cst_12 {dimension_numbers = #tpu.dot_dimension_numbers<[1], [0], [0], [1], [0, 0, 1, 1], [], []>} : vector<16x4xf32>, vector<4x128xf32>, vector<16x128xf32> -> vector<16x128xf32>
    %21 = arith.mulf %9, %20 : vector<16x128xf32>
    %22 = vector.broadcast %4 : f32 to vector<16x128xf32>
    %23 = arith.addf %21, %22 : vector<16x128xf32>
    %c0_13 = arith.constant 0 : index
    %c0_14 = arith.constant 0 : index
    %24 = vector.load %arg6[%c0_13, %c0_14] : memref<16x128xf32, #tpu.memory_space<vmem>>, vector<16x128xf32>
    tpu.vector_store %arg6[%c0_13, %c0_14], %23 {strides = array<i32>} : memref<16x128xf32, #tpu.memory_space<vmem>>, vector<16x128xf32>,
    return
  }
  func.func @transform_0(%arg0: i32) -> i32 {
    %c0_i32 = arith.constant 0 : i32
    %c0_i32_0 = arith.constant 0 : i32
    return %c0_i32 : i32
  }
  func.func @transform_1(%arg0: i32) -> i32 {
    %c0_i32 = arith.constant 0 : i32
    %c0_i32_0 = arith.constant 0 : i32
    return %c0_i32 : i32
  }
  func.func @transform_2(%arg0: i32) -> (i32, i32) {
    %c0_i32 = arith.constant 0 : i32
    %c0_i32_0 = arith.constant 0 : i32
    return %arg0, %c0_i32 : i32, i32
  }
  func.func @transform_3(%arg0: i32) -> (i32, i32) {
    %c0_i32 = arith.constant 0 : i32
    %c0_i32_0 = arith.constant 0 : i32
    %c0_i32_1 = arith.constant 0 : i32
    return %c0_i32, %c0_i32_0 : i32, i32
  }
  func.func @transform_4(%arg0: i32) -> (i32, i32) {
    %c0_i32 = arith.constant 0 : i32
    %c0_i32_0 = arith.constant 0 : i32
    %c0_i32_1 = arith.constant 0 : i32
    return %c0_i32, %c0_i32_0 : i32, i32
  }
  func.func @transform_5(%arg0: i32) -> (i32, i32) {
    %c0_i32 = arith.constant 0 : i32
    %c0_i32_0 = arith.constant 0 : i32
    return %arg0, %c0_i32 : i32, i32
  }
}

</mosaic_0001>

<llo_original>
// kernel: tpu_custom_call.1
$region0: #{tpu_custom_call.1}
  #allocation0 [shape = 'u32[]', space=smem, size = 0x4, offset = 0x4, fixed_abs, tag = 'smem constant byte address 0x4 - core index']
  #allocation1 [shape = 'u32[144,128]{1,0:T(1,128)}', space=vmem, size = 0x12000, scoped, tag = 'internal scratch']
  #allocation2 [shape = 'f32[1]{0:T(128)S(6)}', space=smem, size = 0x200, scoped, tag = 'scoped memory for tpu_custom_call.1']
  #allocation3 [shape = 'f32[1]{0:T(128)S(6)}', space=smem, size = 0x200, scoped, tag = 'scoped memory for tpu_custom_call.1']
  %s0 = inlined_call_operand.<no memory space> [shape: f32[1], index: 0, kind: input, shape index: {}]
  %s1 = inlined_call_operand.<no memory space> [shape: f32[1], index: 1, kind: input, shape index: {}]
  %s2 = inlined_call_operand.vmem [shape: f32[16,128], index: 2, kind: input, shape index: {}]
  %s3 = inlined_call_operand.vmem [shape: f32[128,4], index: 3, kind: input, shape index: {}]
  %s4 = inlined_call_operand.vmem [shape: f32[4,128], index: 4, kind: input, shape index: {}]
  %s5 = inlined_call_operand.hbm [shape: f32[16,128], index: 5, kind: output, shape index: {}]
  %s6 = sld [smem:[#allocation0]]
  $region30: #{tpu_custom_call.1} parent=0
    _
  %s8 = ssub.s32 1, %s6
  %s9 = scalar_select 0, %s8, %s6
  %10 = sst [smem:[#allocation2]] %s0
  %11 = sst [smem:[#allocation3]] %s1
  $region1: #{tpu_custom_call.1} parent=0
    #allocation4 [shape = 'u8[8192]{0}', space=vmem, size = 0x2000, scoped, tag = 'output window, operand 0, single buffered']
    #allocation5 [shape = 's32[1]{0}', space=sflag, size = 0x4, scoped, tag = 'scoped memory for tpu_custom_call.1']
    %12 = vsyncpa [#allocation5], 0
    // Predicated region
    $region2: #{tpu_custom_call.1} parent=1 // pred_check
      _
    $region3: #{tpu_custom_call.1} parent=1 // pred_check_branch
      %14 = sbr.rel (0) target = $region5
    $region4: #{tpu_custom_call.1} parent=1 // pred_region
      _
    $region5: #{tpu_custom_call.1} parent=1 // pred_fallthru
      _
    // Predicated region
    $region6: #{tpu_custom_call.1} parent=1 // pred_check
      _
    $region7: #{tpu_custom_call.1} parent=1 // pred_check_branch
      %16 = sbr.rel (0) target = $region9
    $region8: #{tpu_custom_call.1} parent=1 // pred_region
      _
    $region9: #{tpu_custom_call.1} parent=1 // pred_fallthru
      _
    // Predicated region
    $region10: #{tpu_custom_call.1} parent=1 // pred_check
      _
    $region11: #{tpu_custom_call.1} parent=1 // pred_check_branch
      %18 = sbr.rel (0) target = $region13
    $region12: #{tpu_custom_call.1} parent=1 // pred_region
      _
    $region13: #{tpu_custom_call.1} parent=1 // pred_fallthru
      _
    // Predicated region
    $region14: #{tpu_custom_call.1} parent=1 // pred_check
      _
    $region15: #{tpu_custom_call.1} parent=1 // pred_check_branch
      %20 = sbr.rel (0) target = $region17
    $region16: #{tpu_custom_call.1} parent=1 // pred_region
      _
    $region17: #{tpu_custom_call.1} parent=1 // pred_fallthru
      _
    // Predicated region
    $region18: #{tpu_custom_call.1} parent=1 // pred_check
      _
    $region19: #{tpu_custom_call.1} parent=1 // pred_check_branch
      %22 = sbr.rel (0) target = $region21
    $region20: #{tpu_custom_call.1} parent=1 // pred_region
      _
    $region21: #{tpu_custom_call.1} parent=1 // pred_fallthru
      _
    %v23 = vld [vmem:[%s2] sm:$0xff]
    %v24 = vld [vmem:[%s2 + $0x8] sm:$0xff]
    %v25 = vld [vmem:[%s3] sm:$0xff]
    %v26 = vld [vmem:[%s3 + $0x8] sm:$0xff]
    %v27 = vld [vmem:[%s3 + $0x10] sm:$0xff]
    %v28 = vld [vmem:[%s3 + $0x18] sm:$0xff]
    %v29 = vld [vmem:[%s3 + $0x20] sm:$0xff]
    %v30 = vld [vmem:[%s3 + $0x28] sm:$0xff]
    %v31 = vld [vmem:[%s3 + $0x30] sm:$0xff]
    %v32 = vld [vmem:[%s3 + $0x38] sm:$0xff]
    %v33 = vld [vmem:[%s3 + $0x40] sm:$0xff]
    %v34 = vld [vmem:[%s3 + $0x48] sm:$0xff]
    %v35 = vld [vmem:[%s3 + $0x50] sm:$0xff]
    %v36 = vld [vmem:[%s3 + $0x58] sm:$0xff]
    %v37 = vld [vmem:[%s3 + $0x60] sm:$0xff]
    %v38 = vld [vmem:[%s3 + $0x68] sm:$0xff]
    %v39 = vld [vmem:[%s3 + $0x70] sm:$0xff]
    %v40 = vld [vmem:[%s3 + $0x78] sm:$0xff]
    %v41 = vld [vmem:[%s4] sm:$0xf]
    %s42 = sld [smem:[#allocation2]]
    %s43 = sld [smem:[#allocation3]]
    %44 = vmatprep.subr.mxu0 0.0
    %45 = vmatpush1.msra.mxu0 %v25
    %46 = vmatprep.subr.mxu0 0.0
    %47 = vmatpush1.msra.mxu0 %v26
    %48 = vmatprep.subr.mxu0 0.0
    %49 = vmatpush1.msra.mxu0 %v27
    %50 = vmatprep.subr.mxu0 0.0
    %51 = vmatpush1.msra.mxu0 %v28
    %52 = vmatprep.subr.mxu0 0.0
    %53 = vmatpush1.msra.mxu0 %v29
    %54 = vmatprep.subr.mxu0 0.0
    %55 = vmatpush1.msra.mxu0 %v30
    %56 = vmatprep.subr.mxu0 0.0
    %57 = vmatpush1.msra.mxu0 %v31
    %58 = vmatprep.subr.mxu0 0.0
    %59 = vmatpush1.msra.mxu0 %v32
    %60 = vmatprep.subr.mxu0 0.0
    %61 = vmatpush1.msra.mxu0 %v33
    %62 = vmatprep.subr.mxu0 0.0
    %63 = vmatpush1.msra.mxu0 %v34
    %64 = vmatprep.subr.mxu0 0.0
    %65 = vmatpush1.msra.mxu0 %v35
    %66 = vmatprep.subr.mxu0 0.0
    %67 = vmatpush1.msra.mxu0 %v36
    %68 = vmatprep.subr.mxu0 0.0
    %69 = vmatpush1.msra.mxu0 %v37
    %70 = vmatprep.subr.mxu0 0.0
    %71 = vmatpush1.msra.mxu0 %v38
    %72 = vmatprep.subr.mxu0 0.0
    %73 = vmatpush1.msra.mxu0 %v39
    %74 = vmatprep.subr.mxu0 0.0
    %75 = vmatpush1.msra.mxu0 %v40
    %76 = vmatprep.subr.mxu0 0.0
    %77 = vmatpush1.msra.mxu0 0.0
    %78 = vmatprep.subr.mxu0 0.0
    %79 = vmatpush1.msra.mxu0 0.0
    %80 = vmatprep.subr.mxu0 0.0
    %81 = vmatpush1.msra.mxu0 0.0
    %82 = vmatprep.subr.mxu0 0.0
    %83 = vmatpush1.msra.mxu0 0.0
    %84 = vmatprep.subr.mxu0 0.0
    %85 = vmatpush1.msra.mxu0 0.0
    %86 = vmatprep.subr.mxu0 0.0
    %87 = vmatpush1.msra.mxu0 0.0
    %88 = vmatprep.subr.mxu0 0.0
    %89 = vmatpush1.msra.mxu0 0.0
    %90 = vmatprep.subr.mxu0 0.0
    %91 = vmatpush1.msra.mxu0 0.0
    %92 = vmatprep.subr.mxu0 0.0
    %93 = vmatpush1.msra.mxu0 0.0
    %94 = vmatprep.subr.mxu0 0.0
    %95 = vmatpush1.msra.mxu0 0.0
    %96 = vmatprep.subr.mxu0 0.0
    %97 = vmatpush1.msra.mxu0 0.0
    %98 = vmatprep.subr.mxu0 0.0
    %99 = vmatpush1.msra.mxu0 0.0
    %100 = vmatprep.subr.mxu0 0.0
    %101 = vmatpush1.msra.mxu0 0.0
    %102 = vmatprep.subr.mxu0 0.0
    %103 = vmatpush1.msra.mxu0 0.0
    %104 = vmatprep.subr.mxu0 0.0
    %105 = vmatpush1.msra.mxu0 0.0
    %106 = vmatprep.subr.mxu0 0.0
    %107 = vmatpush1.msra.mxu0 0.0
    %108 = vmatprep.mubr.f32.mxu0 0.0
    %109 = vmatmul.mubr.f32.gmra.mrb[0].mxu0 %v23
    %v110 = vpop.f32.mrb[0].mxu0
    %v111 = vadd.f32 0.0, %v110
    %v112 = vpop.f32.mrb[0].mxu0
    %113 = vmatprep.mubr.f32.mxu0 0.0
    %114 = vmatmul.mubr.f32.gmra.mrb[0].mxu0 %v24
    %v115 = vpop.f32.mrb[0].mxu0
    %v116 = vadd.f32 0.0, %v115
    %v117 = vpop.f32.mrb[0].mxu0
    %118 = vdwg.mxu0
    %v119 = vmul.f32 %v111, 0.03125
    %v120 = vmul.f32 %v116, 0.03125
    %vm121 = vcmask 31744
    %v123 = vsel %vm121, %v119, 0
    %v126 = vsel %vm121, %v120, 0
    %vm128 = vcmask 1043456
    %v130 = vsel %vm128, %v41, 0
    %132 = vmatprep.subr.mxu0 0.0
    %133 = vmatpush1.msra.mxu0 %v130
    %134 = vmatprep.subr.mxu0 0.0
    %135 = vmatpush1.msra.mxu0 0.0
    %136 = vmatprep.subr.mxu0 0.0
    %137 = vmatpush1.msra.mxu0 0.0
    %138 = vmatprep.subr.mxu0 0.0
    %139 = vmatpush1.msra.mxu0 0.0
    %140 = vmatprep.subr.mxu0 0.0
    %141 = vmatpush1.msra.mxu0 0.0
    %142 = vmatprep.subr.mxu0 0.0
    %143 = vmatpush1.msra.mxu0 0.0
    %144 = vmatprep.subr.mxu0 0.0
    %145 = vmatpush1.msra.mxu0 0.0
    %146 = vmatprep.subr.mxu0 0.0
    %147 = vmatpush1.msra.mxu0 0.0
    %148 = vmatprep.subr.mxu0 0.0
    %149 = vmatpush1.msra.mxu0 0.0
    %150 = vmatprep.subr.mxu0 0.0
    %151 = vmatpush1.msra.mxu0 0.0
    %152 = vmatprep.subr.mxu0 0.0
    %153 = vmatpush1.msra.mxu0 0.0
    %154 = vmatprep.subr.mxu0 0.0
    %155 = vmatpush1.msra.mxu0 0.0
    %156 = vmatprep.subr.mxu0 0.0
    %157 = vmatpush1.msra.mxu0 0.0
    %158 = vmatprep.subr.mxu0 0.0
    %159 = vmatpush1.msra.mxu0 0.0
    %160 = vmatprep.subr.mxu0 0.0
    %161 = vmatpush1.msra.mxu0 0.0
    %162 = vmatprep.subr.mxu0 0.0
    %163 = vmatpush1.msra.mxu0 0.0
    %164 = vmatprep.subr.mxu0 0.0
    %165 = vmatpush1.msra.mxu0 0.0
    %166 = vmatprep.subr.mxu0 0.0
    %167 = vmatpush1.msra.mxu0 0.0
    %168 = vmatprep.subr.mxu0 0.0
    %169 = vmatpush1.msra.mxu0 0.0
    %170 = vmatprep.subr.mxu0 0.0
    %171 = vmatpush1.msra.mxu0 0.0
    %172 = vmatprep.subr.mxu0 0.0
    %173 = vmatpush1.msra.mxu0 0.0
    %174 = vmatprep.subr.mxu0 0.0
    %175 = vmatpush1.msra.mxu0 0.0
    %176 = vmatprep.subr.mxu0 0.0
    %177 = vmatpush1.msra.mxu0 0.0
    %178 = vmatprep.subr.mxu0 0.0
    %179 = vmatpush1.msra.mxu0 0.0
    %180 = vmatprep.subr.mxu0 0.0
    %181 = vmatpush1.msra.mxu0 0.0
    %182 = vmatprep.subr.mxu0 0.0
    %183 = vmatpush1.msra.mxu0 0.0
    %184 = vmatprep.subr.mxu0 0.0
    %185 = vmatpush1.msra.mxu0 0.0
    %186 = vmatprep.subr.mxu0 0.0
    %187 = vmatpush1.msra.mxu0 0.0
    %188 = vmatprep.subr.mxu0 0.0
    %189 = vmatpush1.msra.mxu0 0.0
    %190 = vmatprep.subr.mxu0 0.0
    %191 = vmatpush1.msra.mxu0 0.0
    %192 = vmatprep.subr.mxu0 0.0
    %193 = vmatpush1.msra.mxu0 0.0
    %194 = vmatprep.subr.mxu0 0.0
    %195 = vmatpush1.msra.mxu0 0.0
    %196 = vmatprep.mubr.f32.mxu0 0.0
    %197 = vmatmul.mubr.f32.gmra.mrb[0].mxu0 %v123
    %v198 = vpop.f32.mrb[0].mxu0
    %v199 = vadd.f32 0.0, %v198
    %v200 = vpop.f32.mrb[0].mxu0
    %201 = vmatprep.mubr.f32.mxu0 0.0
    %202 = vmatmul.mubr.f32.gmra.mrb[0].mxu0 %v126
    %v203 = vpop.f32.mrb[0].mxu0
    %v204 = vadd.f32 0.0, %v203
    %v205 = vpop.f32.mrb[0].mxu0
    %206 = vdwg.mxu0
    %v207 = vsub.f32 %v23, %v199
    %v208 = vsub.f32 %v24, %v204
    %v209 = vmul.f32 %v207, %v207
    %v210 = vmul.f32 %v208, %v208
    %211 = vmatprep.subr.mxu0 0.0
    %212 = vmatpush1.msra.mxu0 %v25
    %213 = vmatprep.subr.mxu0 0.0
    %214 = vmatpush1.msra.mxu0 %v26
    %215 = vmatprep.subr.mxu0 0.0
    %216 = vmatpush1.msra.mxu0 %v27
    %217 = vmatprep.subr.mxu0 0.0
    %218 = vmatpush1.msra.mxu0 %v28
    %219 = vmatprep.subr.mxu0 0.0
    %220 = vmatpush1.msra.mxu0 %v29
    %221 = vmatprep.subr.mxu0 0.0
    %222 = vmatpush1.msra.mxu0 %v30
    %223 = vmatprep.subr.mxu0 0.0
    %224 = vmatpush1.msra.mxu0 %v31
    %225 = vmatprep.subr.mxu0 0.0
    %226 = vmatpush1.msra.mxu0 %v32
    %227 = vmatprep.subr.mxu0 0.0
    %228 = vmatpush1.msra.mxu0 %v33
    %229 = vmatprep.subr.mxu0 0.0
    %230 = vmatpush1.msra.mxu0 %v34
    %231 = vmatprep.subr.mxu0 0.0
    %232 = vmatpush1.msra.mxu0 %v35
    %233 = vmatprep.subr.mxu0 0.0
    %234 = vmatpush1.msra.mxu0 %v36
    %235 = vmatprep.subr.mxu0 0.0
    %236 = vmatpush1.msra.mxu0 %v37
    %237 = vmatprep.subr.mxu0 0.0
    %238 = vmatpush1.msra.mxu0 %v38
    %239 = vmatprep.subr.mxu0 0.0
    %240 = vmatpush1.msra.mxu0 %v39
    %241 = vmatprep.subr.mxu0 0.0
    %242 = vmatpush1.msra.mxu0 %v40
    %243 = vmatprep.subr.mxu0 0.0
    %244 = vmatpush1.msra.mxu0 0.0
    %245 = vmatprep.subr.mxu0 0.0
    %246 = vmatpush1.msra.mxu0 0.0
    %247 = vmatprep.subr.mxu0 0.0
    %248 = vmatpush1.msra.mxu0 0.0
    %249 = vmatprep.subr.mxu0 0.0
    %250 = vmatpush1.msra.mxu0 0.0
    %251 = vmatprep.subr.mxu0 0.0
    %252 = vmatpush1.msra.mxu0 0.0
    %253 = vmatprep.subr.mxu0 0.0
    %254 = vmatpush1.msra.mxu0 0.0
    %255 = vmatprep.subr.mxu0 0.0
    %256 = vmatpush1.msra.mxu0 0.0
    %257 = vmatprep.subr.mxu0 0.0
    %258 = vmatpush1.msra.mxu0 0.0
    %259 = vmatprep.subr.mxu0 0.0
    %260 = vmatpush1.msra.mxu0 0.0
    %261 = vmatprep.subr.mxu0 0.0
    %262 = vmatpush1.msra.mxu0 0.0
    %263 = vmatprep.subr.mxu0 0.0
    %264 = vmatpush1.msra.mxu0 0.0
    %265 = vmatprep.subr.mxu0 0.0
    %266 = vmatpush1.msra.mxu0 0.0
    %267 = vmatprep.subr.mxu0 0.0
    %268 = vmatpush1.msra.mxu0 0.0
    %269 = vmatprep.subr.mxu0 0.0
    %270 = vmatpush1.msra.mxu0 0.0
    %271 = vmatprep.subr.mxu0 0.0
    %272 = vmatpush1.msra.mxu0 0.0
    %273 = vmatprep.subr.mxu0 0.0
    %274 = vmatpush1.msra.mxu0 0.0
    %275 = vmatprep.mubr.f32.mxu0 0.0
    %276 = vmatmul.mubr.f32.gmra.mrb[0].mxu0 %v209
    %v277 = vpop.f32.mrb[0].mxu0
    %v278 = vadd.f32 0.0, %v277
    %v279 = vpop.f32.mrb[0].mxu0
    %280 = vmatprep.mubr.f32.mxu0 0.0
    %281 = vmatmul.mubr.f32.gmra.mrb[0].mxu0 %v210
    %v282 = vpop.f32.mrb[0].mxu0
    %v283 = vadd.f32 0.0, %v282
    %v284 = vpop.f32.mrb[0].mxu0
    %285 = vdwg.mxu0
    %v286 = vmul.f32 %v278, 0.032258064
    %v287 = vmul.f32 %v283, 0.032258064
    %v288 = vrsqrt.pop %v286
    %v289 = vmul.f32 %v286, %v288
    %vm290 = vcmp.eq.f32.partialorder %v286, inf
    %v291 = vsel %vm290, %v286, %v289
    %vm292 = vcmp.eq.f32.partialorder %v286, 0.0
    %v293 = vand.u32 %v286, 2147483648
    %v294 = vsel %vm292, %v293, %v291
    %v295 = vrsqrt.pop %v287
    %v296 = vmul.f32 %v287, %v295
    %vm297 = vcmp.eq.f32.partialorder %v287, inf
    %v298 = vsel %vm297, %v287, %v296
    %vm299 = vcmp.eq.f32.partialorder %v287, 0.0
    %v300 = vand.u32 %v287, 2147483648
    %v301 = vsel %vm299, %v300, %v298
    %v302 = vadd.f32 %v294, 1e-06
    %v303 = vadd.f32 %v301, 1e-06
    %v304 = vrcp.pop %v302
    %v305 = vrcp.pop %v303
    %v306 = vstv %s42
    %v307 = vmul.f32 %v304, %v306
    %v308 = vmul.f32 %v305, %v306
    %v310 = vsel %vm121, %v307, 0
    %v313 = vsel %vm121, %v308, 0
    %315 = vmatprep.subr.mxu0 0.0
    %316 = vmatpush1.msra.mxu0 %v130
    %317 = vmatprep.subr.mxu0 0.0
    %318 = vmatpush1.msra.mxu0 0.0
    %319 = vmatprep.subr.mxu0 0.0
    %320 = vmatpush1.msra.mxu0 0.0
    %321 = vmatprep.subr.mxu0 0.0
    %322 = vmatpush1.msra.mxu0 0.0
    %323 = vmatprep.subr.mxu0 0.0
    %324 = vmatpush1.msra.mxu0 0.0
    %325 = vmatprep.subr.mxu0 0.0
    %326 = vmatpush1.msra.mxu0 0.0
    %327 = vmatprep.subr.mxu0 0.0
    %328 = vmatpush1.msra.mxu0 0.0
    %329 = vmatprep.subr.mxu0 0.0
    %330 = vmatpush1.msra.mxu0 0.0
    %331 = vmatprep.subr.mxu0 0.0
    %332 = vmatpush1.msra.mxu0 0.0
    %333 = vmatprep.subr.mxu0 0.0
    %334 = vmatpush1.msra.mxu0 0.0
    %335 = vmatprep.subr.mxu0 0.0
    %336 = vmatpush1.msra.mxu0 0.0
    %337 = vmatprep.subr.mxu0 0.0
    %338 = vmatpush1.msra.mxu0 0.0
    %339 = vmatprep.subr.mxu0 0.0
    %340 = vmatpush1.msra.mxu0 0.0
    %341 = vmatprep.subr.mxu0 0.0
    %342 = vmatpush1.msra.mxu0 0.0
    %343 = vmatprep.subr.mxu0 0.0
    %344 = vmatpush1.msra.mxu0 0.0
    %345 = vmatprep.subr.mxu0 0.0
    %346 = vmatpush1.msra.mxu0 0.0
    %347 = vmatprep.subr.mxu0 0.0
    %348 = vmatpush1.msra.mxu0 0.0
    %349 = vmatprep.subr.mxu0 0.0
    %350 = vmatpush1.msra.mxu0 0.0
    %351 = vmatprep.subr.mxu0 0.0
    %352 = vmatpush1.msra.mxu0 0.0
    %353 = vmatprep.subr.mxu0 0.0
    %354 = vmatpush1.msra.mxu0 0.0
    %355 = vmatprep.subr.mxu0 0.0
    %356 = vmatpush1.msra.mxu0 0.0
    %357 = vmatprep.subr.mxu0 0.0
    %358 = vmatpush1.msra.mxu0 0.0
    %359 = vmatprep.subr.mxu0 0.0
    %360 = vmatpush1.msra.mxu0 0.0
    %361 = vmatprep.subr.mxu0 0.0
    %362 = vmatpush1.msra.mxu0 0.0
    %363 = vmatprep.subr.mxu0 0.0
    %364 = vmatpush1.msra.mxu0 0.0
    %365 = vmatprep.subr.mxu0 0.0
    %366 = vmatpush1.msra.mxu0 0.0
    %367 = vmatprep.subr.mxu0 0.0
    %368 = vmatpush1.msra.mxu0 0.0
    %369 = vmatprep.subr.mxu0 0.0
    %370 = vmatpush1.msra.mxu0 0.0
    %371 = vmatprep.subr.mxu0 0.0
    %372 = vmatpush1.msra.mxu0 0.0
    %373 = vmatprep.subr.mxu0 0.0
    %374 = vmatpush1.msra.mxu0 0.0
    %375 = vmatprep.subr.mxu0 0.0
    %376 = vmatpush1.msra.mxu0 0.0
    %377 = vmatprep.subr.mxu0 0.0
    %378 = vmatpush1.msra.mxu0 0.0
    %379 = vmatprep.mubr.f32.mxu0 0.0
    %380 = vmatmul.mubr.f32.gmra.mrb[0].mxu0 %v310
    %v381 = vpop.f32.mrb[0].mxu0
    %v382 = vadd.f32 0.0, %v381
    %v383 = vpop.f32.mrb[0].mxu0
    %384 = vmatprep.mubr.f32.mxu0 0.0
    %385 = vmatmul.mubr.f32.gmra.mrb[0].mxu0 %v313
    %v386 = vpop.f32.mrb[0].mxu0
    %v387 = vadd.f32 0.0, %v386
    %v388 = vpop.f32.mrb[0].mxu0
    %389 = vdwg.mxu0
    %v390 = vmul.f32 %v207, %v382
    %v391 = vmul.f32 %v208, %v387
    %v392 = vstv %s43
    %v393 = vadd.f32 %v390, %v392
    %v394 = vadd.f32 %v391, %v392
    %395 = vst [vmem:[#allocation4] sm:$0xff] %v393
    %396 = vst [vmem:[#allocation4 + $0x8] sm:$0xff] %v394
    // Predicated region
    $region22: #{tpu_custom_call.1} parent=1 // pred_check
      _
    $region23: #{tpu_custom_call.1} parent=1 // pred_check_branch
      %398 = sbr.rel (0) target = $region25
    $region24: #{tpu_custom_call.1} parent=1 // pred_region
      %s400 = ssub.s32 256, 256
      %401 = vsyncadd [#allocation5], %s400
      %s402 = sshll.u32 [#allocation4], 4
      %s403 = int_to_ptr.vmem [resolvable:$true] %s402
      %408 = dma.vmem_to_hbm [thread:$0]  %s403, 256, %s5, [#allocation5], 128, 128, 8
    $region25: #{tpu_custom_call.1} parent=1 // pred_fallthru
      _
    // Predicated region
    $region26: #{tpu_custom_call.1} parent=1 // pred_check
      _
    $region27: #{tpu_custom_call.1} parent=1 // pred_check_branch
      %410 = sbr.rel (0) target = $region29
    $region28: #{tpu_custom_call.1} parent=1 // pred_region
      %411 = dma.done [#allocation5], 256
    $region29: #{tpu_custom_call.1} parent=1 // pred_fallthru
      _
    %412 = vsyncpa [#allocation5], 1

</llo_original>
